<compile_context>
chip_gen: v7x
topology: tpu7x:2x2x1
jax: 0.10.0
libtpu: 0.0.40
codegen_flags: <defaults>
</compile_context>

<pallas_src>
import numpy as np
import jax
import jax.numpy as jnp
from jax import lax
from jax.experimental import pallas as pl
from jax.experimental.pallas import tpu as pltpu

# ----- target-network configuration ---------------------------------------
B, D_IN, HIDDEN, D_OUT = 8, 32, 128, 16
N_SAMPLES = 4   # number of hypernet-emitted param vectors batched per call

# (name, shape) in the exact order torch's named_parameters() would yield them
PARAM_SHAPES = [
    ("0.weight", (HIDDEN, D_IN)),
    ("0.bias", (HIDDEN,)),
    ("2.weight", (D_OUT, HIDDEN)),
    ("2.bias", (D_OUT,)),
]
TOTAL_PARAMS = sum(int(np.prod(s)) for _, s in PARAM_SHAPES)


# ----- Pallas kernel: fused 2-layer MLP forward (n_blk samples per step) ----
def _mlp_kernel(x_ref, w1t_ref, b1_ref, w2_ref, b2_ref, o_ref):
    # Blocks per grid step (n_blk samples at once), all f32:
    #   x    (n_blk, B, D_IN)
    #   w1t  (n_blk, D_IN, HIDDEN)   (K, N) layout -> no in-kernel transpose
    #   b1   (n_blk, 1, HIDDEN)
    #   w2   (n_blk, D_OUT, HIDDEN)  torch (out, in) layout, lane-dense
    #   b2   (n_blk, 1, D_OUT)
    #   o    (n_blk, 1, B*D_OUT)     lane-dense output slab
    x = x_ref[...]
    h = jnp.einsum("nbk,nkh->nbh", x, w1t_ref[...],
                   preferred_element_type=jnp.float32)
    h = jnp.maximum(h + b1_ref[...], 0.0)
    o = jnp.einsum("nbh,noh->nbo", h, w2_ref[...],
                   preferred_element_type=jnp.float32)
    o = o + b2_ref[...]                                   # (n_blk, B, D_OUT)
    # Lane-dense store: flatten (B, D_OUT) -> B*D_OUT lanes by concatenating
    # the B rows along the lane axis (row-major, identical to a reshape).
    o_flat = jnp.concatenate([o[:, bi, :] for bi in range(o.shape[1])], axis=-1)
    o_ref[:, 0, :] = o_flat.astype(o_ref.dtype)


# ----- FunctionalParamVectorWrapper.forward equivalent (batched) -----------
def functional_param_vector_forward_batched(param_vectors: jax.Array,
                                            x: jax.Array) -> jax.Array:
    """param_vectors: (N, TOTAL_PARAMS) f32; x: (N, B, D_IN) f32 -> (N, B, D_OUT)."""
    n, b = param_vectors.shape[0], x.shape[1]

    # Glue: slice the flat vectors exactly like the PyTorch wrapper does
    # (contiguous slices + row-major reshapes).  w1 additionally gets a
    # transpose to (K, N) order -- this fuses into the copy XLA already emits.
    offsets = {}
    start = 0
    for name, shape in PARAM_SHAPES:
        size = int(np.prod(shape))
        offsets[name] = (start, size, shape)
        start += size

    def take(name):
        s, sz, shp = offsets[name]
        return lax.slice_in_dim(param_vectors, s, s + sz, axis=1).reshape((n,) + shp)

    w1t = jnp.transpose(take("0.weight"), (0, 2, 1))   # (N, D_IN, HIDDEN)
    b1 = take("0.bias").reshape(n, 1, HIDDEN)          # (N, 1, HIDDEN)
    w2 = take("2.weight")                              # (N, D_OUT, HIDDEN)
    b2 = take("2.bias").reshape(n, 1, D_OUT)           # (N, 1, D_OUT)

    # Grid: 2 parallel steps when possible (feeds both TensorCores on v7x);
    # otherwise a single step (no upside to extra steps on single-TC v5e/v6e).
    n_steps = 2 if (n >= 2 and n % 2 == 0) else 1
    n_blk = n // n_steps

    # TODO(synk): the PyTorch wrapper also handles the recursive HyperNet case
    # (torch.func.functional_call + self.module.propagate); only the plain
    # nn.Module branch is implemented here.

    out_flat = pl.pallas_call(
        _mlp_kernel,
        out_shape=jax.ShapeDtypeStruct((n, 1, b * D_OUT), x.dtype),
        grid=(n_steps,),
        in_specs=[
            pl.BlockSpec((n_blk, b, D_IN), lambda i: (i, 0, 0)),
            pl.BlockSpec((n_blk, D_IN, HIDDEN), lambda i: (i, 0, 0)),
            pl.BlockSpec((n_blk, 1, HIDDEN), lambda i: (i, 0, 0)),
            pl.BlockSpec((n_blk, D_OUT, HIDDEN), lambda i: (i, 0, 0)),
            pl.BlockSpec((n_blk, 1, D_OUT), lambda i: (i, 0, 0)),
        ],
        out_specs=pl.BlockSpec((n_blk, 1, b * D_OUT), lambda i: (i, 0, 0)),
        compiler_params=pltpu.CompilerParams(
            # Sample blocks are independent -> shard across v7x's 2 TCs;
            # no-op on single-TC v5e/v6e.
            dimension_semantics=("parallel",)),
    )(x, w1t, b1, w2, b2)

    return out_flat.reshape(n, b, D_OUT)


def functional_param_vector_forward(param_vector: jax.Array, x: jax.Array) -> jax.Array:
    """Single-vector interface matching the original module signature:
       param_vector (TOTAL_PARAMS,), x (B, D_IN) -> (B, D_OUT)."""
    return functional_param_vector_forward_batched(param_vector[None], x[None])[0]


# ----- pure-JAX f32 reference (for correctness check) ----------------------
def _reference(param_vectors, x):
    outs = []
    for s in range(param_vectors.shape[0]):
        pv = param_vectors[s]
        params = {}
        start = 0
        for name, shape in PARAM_SHAPES:
            end = start + int(np.prod(shape))
            params[name] = pv[start:end].reshape(shape)
            start = end
        h = jnp.maximum(x[s] @ params["0.weight"].T + params["0.bias"], 0.0)
        outs.append(h @ params["2.weight"].T + params["2.bias"])
    return jnp.stack(outs)


if __name__ == "__main__":
    key = jax.random.PRNGKey(0)
    k_pv, k_x = jax.random.split(key)

    # Deterministic synthetic hypernetwork outputs (one flat param vector per
    # sample) + per-sample inputs.
    param_vectors = 0.05 * jax.random.normal(
        k_pv, (N_SAMPLES, TOTAL_PARAMS), dtype=jnp.float32)
    x = jax.random.normal(k_x, (N_SAMPLES, B, D_IN), dtype=jnp.float32)

    out = jax.block_until_ready(
        functional_param_vector_forward_batched(param_vectors, x))

    ref = _reference(param_vectors, x)
    # f32 end-to-end (no bf16 casts) -> tight tolerance vs the f32 reference
    # (slack only for the TPU's default f32 matmul pass precision).
    np.testing.assert_allclose(np.asarray(out), np.asarray(ref),
                               rtol=1e-2, atol=2e-3)

    # Single-vector interface (matches the original PyTorch wrapper signature).
    out1 = jax.block_until_ready(
        functional_param_vector_forward(param_vectors[0], x[0]))
    np.testing.assert_allclose(np.asarray(out1), np.asarray(ref[0]),
                               rtol=1e-2, atol=2e-3)

    print("KERNEL_OK")
</pallas_src>

<mosaic_0001>
module attributes {stable_mosaic.version = 11 : i64} {
  func.func @_mlp_kernel(%arg0: i32, %arg1: memref<2x8x32xf32, #tpu.memory_space<vmem>>, %arg2: memref<2x32x128xf32, #tpu.memory_space<vmem>>, %arg3: memref<2x1x128xf32, #tpu.memory_space<vmem>>, %arg4: memref<2x16x128xf32, #tpu.memory_space<vmem>>, %arg5: memref<2x1x16xf32, #tpu.memory_space<vmem>>, %arg6: memref<2x1x128xf32, #tpu.memory_space<vmem>>) attributes {dimension_semantics = [#tpu.dimension_semantics<parallel>], iteration_bounds = array<i64: 2>, scalar_prefetch = 0 : i64, scratch_operands = 0 : i64, tpu.core_type = #tpu.core_type<tc>, window_params = [{transform_indices = @transform_0, window_bounds = array<i64: 2, 8, 32>}, {transform_indices = @transform_1, window_bounds = array<i64: 2, 32, 128>}, {transform_indices = @transform_2, window_bounds = array<i64: 2, 1, 128>}, {transform_indices = @transform_3, window_bounds = array<i64: 2, 16, 128>}, {transform_indices = @transform_4, window_bounds = array<i64: 2, 1, 16>}, {transform_indices = @transform_5, window_bounds = array<i64: 2, 1, 128>}]} {
    %c0 = arith.constant 0 : index
    %c0_0 = arith.constant 0 : index
    %c0_1 = arith.constant 0 : index
    %0 = vector.load %arg1[%c0, %c0_0, %c0_1] : memref<2x8x32xf32, #tpu.memory_space<vmem>>, vector<2x8x32xf32>
    %c0_2 = arith.constant 0 : index
    %c0_3 = arith.constant 0 : index
    %c0_4 = arith.constant 0 : index
    %1 = vector.load %arg2[%c0_2, %c0_3, %c0_4] : memref<2x32x128xf32, #tpu.memory_space<vmem>>, vector<2x32x128xf32>
    "tpu.trace_start"() <{level = 10 : i32, message = "nbk,nkh->nbh"}> : () -> ()
    %cst = arith.constant dense<0.000000e+00> : vector<2x8x128xf32>
    %2 = tpu.matmul %0, %1, %cst {dimension_numbers = #tpu.dot_dimension_numbers<[2], [1], [1], [2], [0, 0, 0, 1, 1, 2], [0], [0]>} : vector<2x8x32xf32>, vector<2x32x128xf32>, vector<2x8x128xf32> -> vector<2x8x128xf32>
    "tpu.trace_stop"() : () -> ()
    %c0_5 = arith.constant 0 : index
    %c0_6 = arith.constant 0 : index
    %c0_7 = arith.constant 0 : index
    %3 = vector.load %arg3[%c0_5, %c0_6, %c0_7] : memref<2x1x128xf32, #tpu.memory_space<vmem>>, vector<2x1x128xf32>
    %4 = vector.broadcast %3 : vector<2x1x128xf32> to vector<2x8x128xf32>
    %5 = arith.addf %2, %4 : vector<2x8x128xf32>
    %cst_8 = arith.constant 0.000000e+00 : f32
    %6 = vector.broadcast %cst_8 : f32 to vector<2x8x128xf32>
    %7 = arith.maximumf %5, %6 : vector<2x8x128xf32>
    %c0_9 = arith.constant 0 : index
    %c0_10 = arith.constant 0 : index
    %c0_11 = arith.constant 0 : index
    %8 = vector.load %arg4[%c0_9, %c0_10, %c0_11] : memref<2x16x128xf32, #tpu.memory_space<vmem>>, vector<2x16x128xf32>
    "tpu.trace_start"() <{level = 10 : i32, message = "nbh,noh->nbo"}> : () -> ()
    %cst_12 = arith.constant dense<0.000000e+00> : vector<2x8x16xf32>
    %9 = tpu.matmul %7, %8, %cst_12 {dimension_numbers = #tpu.dot_dimension_numbers<[2], [2], [1], [1], [0, 0, 0, 1, 1, 1], [0], [0]>} : vector<2x8x128xf32>, vector<2x16x128xf32>, vector<2x8x16xf32> -> vector<2x8x16xf32>
    "tpu.trace_stop"() : () -> ()
    %c0_13 = arith.constant 0 : index
    %c0_14 = arith.constant 0 : index
    %c0_15 = arith.constant 0 : index
    %10 = vector.load %arg5[%c0_13, %c0_14, %c0_15] : memref<2x1x16xf32, #tpu.memory_space<vmem>>, vector<2x1x16xf32>
    %11 = vector.broadcast %10 : vector<2x1x16xf32> to vector<2x8x16xf32>
    %12 = arith.addf %9, %11 : vector<2x8x16xf32>
    %13 = vector.extract_strided_slice %12 {offsets = [0, 0, 0], sizes = [2, 1, 16], strides = [1, 1, 1]} : vector<2x8x16xf32> to vector<2x1x16xf32>
    %14 = vector.shape_cast %13 : vector<2x1x16xf32> to vector<2x16xf32>
    %15 = vector.extract_strided_slice %12 {offsets = [0, 1, 0], sizes = [2, 1, 16], strides = [1, 1, 1]} : vector<2x8x16xf32> to vector<2x1x16xf32>
    %16 = vector.shape_cast %15 : vector<2x1x16xf32> to vector<2x16xf32>
    %17 = vector.extract_strided_slice %12 {offsets = [0, 2, 0], sizes = [2, 1, 16], strides = [1, 1, 1]} : vector<2x8x16xf32> to vector<2x1x16xf32>
    %18 = vector.shape_cast %17 : vector<2x1x16xf32> to vector<2x16xf32>
    %19 = vector.extract_strided_slice %12 {offsets = [0, 3, 0], sizes = [2, 1, 16], strides = [1, 1, 1]} : vector<2x8x16xf32> to vector<2x1x16xf32>
    %20 = vector.shape_cast %19 : vector<2x1x16xf32> to vector<2x16xf32>
    %21 = vector.extract_strided_slice %12 {offsets = [0, 4, 0], sizes = [2, 1, 16], strides = [1, 1, 1]} : vector<2x8x16xf32> to vector<2x1x16xf32>
    %22 = vector.shape_cast %21 : vector<2x1x16xf32> to vector<2x16xf32>
    %23 = vector.extract_strided_slice %12 {offsets = [0, 5, 0], sizes = [2, 1, 16], strides = [1, 1, 1]} : vector<2x8x16xf32> to vector<2x1x16xf32>
    %24 = vector.shape_cast %23 : vector<2x1x16xf32> to vector<2x16xf32>
    %25 = vector.extract_strided_slice %12 {offsets = [0, 6, 0], sizes = [2, 1, 16], strides = [1, 1, 1]} : vector<2x8x16xf32> to vector<2x1x16xf32>
    %26 = vector.shape_cast %25 : vector<2x1x16xf32> to vector<2x16xf32>
    %27 = vector.extract_strided_slice %12 {offsets = [0, 7, 0], sizes = [2, 1, 16], strides = [1, 1, 1]} : vector<2x8x16xf32> to vector<2x1x16xf32>
    %28 = vector.shape_cast %27 : vector<2x1x16xf32> to vector<2x16xf32>
    %29 = tpu.concatenate %14, %16, %18, %20, %22, %24, %26, %28 in 1 : vector<2x16xf32>, vector<2x16xf32>, vector<2x16xf32>, vector<2x16xf32>, vector<2x16xf32>, vector<2x16xf32>, vector<2x16xf32>, vector<2x16xf32> -> vector<2x128xf32>
    %c0_16 = arith.constant 0 : index
    %c0_17 = arith.constant 0 : index
    %c0_18 = arith.constant 0 : index
    %30 = vector.load %arg6[%c0_16, %c0_17, %c0_18] : memref<2x1x128xf32, #tpu.memory_space<vmem>>, vector<2x1x128xf32>
    %31 = vector.shape_cast %30 : vector<2x1x128xf32> to vector<2x128xf32>
    %32 = vector.shape_cast %29 : vector<2x128xf32> to vector<2x1x128xf32>
    tpu.vector_store %arg6[%c0_16, %c0_17, %c0_18], %32 {strides = array<i32>} : memref<2x1x128xf32, #tpu.memory_space<vmem>>, vector<2x1x128xf32>,
    return
  }
  func.func @transform_0(%arg0: i32) -> (i32, i32, i32) {
    %c0_i32 = arith.constant 0 : i32
    %c0_i32_0 = arith.constant 0 : i32
    %c0_i32_1 = arith.constant 0 : i32
    return %arg0, %c0_i32, %c0_i32_0 : i32, i32, i32
  }
  func.func @transform_1(%arg0: i32) -> (i32, i32, i32) {
    %c0_i32 = arith.constant 0 : i32
    %c0_i32_0 = arith.constant 0 : i32
    %c0_i32_1 = arith.constant 0 : i32
    return %arg0, %c0_i32, %c0_i32_0 : i32, i32, i32
  }
  func.func @transform_2(%arg0: i32) -> (i32, i32, i32) {
    %c0_i32 = arith.constant 0 : i32
    %c0_i32_0 = arith.constant 0 : i32
    %c0_i32_1 = arith.constant 0 : i32
    return %arg0, %c0_i32, %c0_i32_0 : i32, i32, i32
  }
  func.func @transform_3(%arg0: i32) -> (i32, i32, i32) {
    %c0_i32 = arith.constant 0 : i32
    %c0_i32_0 = arith.constant 0 : i32
    %c0_i32_1 = arith.constant 0 : i32
    return %arg0, %c0_i32, %c0_i32_0 : i32, i32, i32
  }
  func.func @transform_4(%arg0: i32) -> (i32, i32, i32) {
    %c0_i32 = arith.constant 0 : i32
    %c0_i32_0 = arith.constant 0 : i32
    %c0_i32_1 = arith.constant 0 : i32
    return %arg0, %c0_i32, %c0_i32_0 : i32, i32, i32
  }
  func.func @transform_5(%arg0: i32) -> (i32, i32, i32) {
    %c0_i32 = arith.constant 0 : i32
    %c0_i32_0 = arith.constant 0 : i32
    %c0_i32_1 = arith.constant 0 : i32
    return %arg0, %c0_i32, %c0_i32_0 : i32, i32, i32
  }
}

</mosaic_0001>

<llo_original>
// kernel: tpu_custom_call.1
$region0: #{tpu_custom_call.1}
  #allocation0 [shape = 'u32[]', space=smem, size = 0x4, offset = 0x4, fixed_abs, tag = 'smem constant byte address 0x4 - core index']
  #allocation1 [shape = 'u32[144,128]{1,0:T(1,128)}', space=vmem, size = 0x12000, scoped, tag = 'internal scratch']
  %s0 = inlined_call_operand.hbm [shape: f32[4,8,32], index: 0, kind: input, shape index: {}]
  %s1 = inlined_call_operand.hbm [shape: f32[4,32,128], index: 1, kind: input, shape index: {}]
  %s2 = inlined_call_operand.vmem [shape: f32[4,1,128], index: 2, kind: input, shape index: {}]
  %s3 = inlined_call_operand.hbm [shape: f32[4,16,128], index: 3, kind: input, shape index: {}]
  %s4 = inlined_call_operand.vmem [shape: f32[4,1,16], index: 4, kind: input, shape index: {}]
  %s5 = inlined_call_operand.hbm [shape: f32[4,1,128], index: 5, kind: output, shape index: {}]
  %s6 = sld [smem:[#allocation0]]
  $region65: #{tpu_custom_call.1} parent=0
    _
  %s8 = ssub.s32 1, %s6
  %s9 = scalar_select 0, %s8, %s6
  $region1: #{tpu_custom_call.1} parent=0
    #allocation2 [shape = 'u8[16384]{0}', space=vmem, size = 0x4000, scoped, tag = 'input window, operand 0']
    #allocation3 [shape = 's32[2]{0}', space=sflag, size = 0x8, scoped, tag = 'scoped memory for tpu_custom_call.1']
    #allocation4 [shape = 's32[2]{0}', space=sflag, size = 0x8, scoped, tag = 'scoped memory for tpu_custom_call.1']
    #allocation5 [shape = 'u8[65536]{0}', space=vmem, size = 0x10000, scoped, tag = 'input window, operand 1']
    #allocation6 [shape = 's32[2]{0}', space=sflag, size = 0x8, scoped, tag = 'scoped memory for tpu_custom_call.1']
    #allocation7 [shape = 'u8[32768]{0}', space=vmem, size = 0x8000, scoped, tag = 'input window, operand 3']
    #allocation8 [shape = 'u8[2048]{0}', space=vmem, size = 0x800, scoped, tag = 'output window, operand 0']
    %10 = vsyncpa [#allocation3], 0
    %s11 = scalar_lea.sflag [#allocation3], 1
    %12 = vsyncpa %s11, 0
    %13 = vsyncpa [#allocation6], 0
    %s14 = scalar_lea.sflag [#allocation6], 1
    %15 = vsyncpa %s14, 0
    %16 = vsyncpa [#allocation4], 0
    %s17 = scalar_lea.sflag [#allocation4], 1
    %18 = vsyncpa %s17, 0
    loop: start=0, step=1, limit=4
    $region2: #{tpu_custom_call.1} parent=1 // loop_pre_header
      _
    $region3: #{tpu_custom_call.1} parent=1 // loop_header
      %s20 = sphi 0, %s24
      %p21 = scmp.ge.s32.totalorder %s20, 4
      %s30 = sphi 0, %s32
      %s33 = sphi 0, %s30
      %s34 = sphi 0, %s33
      %s50 = sphi 0, %s34
      %s56 = sphi 0, %s58
      %s59 = sphi 0, %s56
      %s60 = sphi 0, %s59
      %s76 = sphi 0, %s60
      %s82 = sphi 0, %s84
      %s85 = sphi 0, %s82
      %s86 = sphi 0, %s85
      %s102 = sphi 0, %s86
      %s108 = sphi 0, %s110
      %s111 = sphi 0, %s108
      %s112 = sphi 0, %s111
      %s128 = sphi 0, %s112
      %s134 = sphi 0, %s136
      %s137 = sphi 0, %s134
      %s138 = sphi 0, %s137
      %s154 = sphi 0, %s138
      %s160 = sphi 0, %s162
      %s163 = sphi 0, %s160
      %s164 = sphi 0, %s163
      %s180 = sphi 0, %s164
    $region4: #{tpu_custom_call.1} parent=1 // loop_header_branch
      %23 = sbr.rel (%p21) target = $region8
    $region5: #{tpu_custom_call.1} parent=1 // loop_body
      %s25 = ssub.s32 %s20, 1
      %s26 = ssub.s32 %s20, 2
      %s27 = sadd.s32 %s20, 1
      %s28 = ssub.s32 %s20, %s27
      %p29 = scmp.eq.s32.totalorder %s28, 0
      %s31 = sadd.s32 %s30, 1
      %s32 = scalar_select %p29, %s30, %s31
      %p35 = pneg %p29
      %p36 = scmp.eq.s32.totalorder %s20, 1
      %p37 = por %p35, %p36
      %p38 = scmp.ne.s32.totalorder %s30, %s33
      %p39 = scmp.eq.s32.totalorder %s20, 0
      %p40 = por %p38, %p39
      %p41 = scmp.ne.s32.totalorder %s30, %s33
      %p42 = scmp.eq.s32.totalorder %s25, 1
      %p43 = por %p41, %p42
      %p44 = scmp.ne.s32.totalorder %s33, %s34
      %p45 = scmp.eq.s32.totalorder %s25, 0
      %p46 = por %p44, %p45
      %p47 = scmp.ne.s32.totalorder %s33, %s34
      %p48 = scmp.eq.s32.totalorder %s26, 1
      %p49 = por %p47, %p48
      %p51 = scmp.ne.s32.totalorder %s34, %s50
      %p52 = scmp.eq.s32.totalorder %s26, 0
      %p53 = por %p51, %p52
      %s54 = ssub.s32 %s20, %s27
      %p55 = scmp.eq.s32.totalorder %s54, 0
      %s57 = sadd.s32 %s56, 1
      %s58 = scalar_select %p55, %s56, %s57
      %p61 = pneg %p55
      %p62 = scmp.eq.s32.totalorder %s20, 1
      %p63 = por %p61, %p62
      %p64 = scmp.ne.s32.totalorder %s56, %s59
      %p65 = scmp.eq.s32.totalorder %s20, 0
      %p66 = por %p64, %p65
      %p67 = scmp.ne.s32.totalorder %s56, %s59
      %p68 = scmp.eq.s32.totalorder %s25, 1
      %p69 = por %p67, %p68
      %p70 = scmp.ne.s32.totalorder %s59, %s60
      %p71 = scmp.eq.s32.totalorder %s25, 0
      %p72 = por %p70, %p71
      %p73 = scmp.ne.s32.totalorder %s59, %s60
      %p74 = scmp.eq.s32.totalorder %s26, 1
      %p75 = por %p73, %p74
      %p77 = scmp.ne.s32.totalorder %s60, %s76
      %p78 = scmp.eq.s32.totalorder %s26, 0
      %p79 = por %p77, %p78
      %s80 = ssub.s32 %s20, %s27
      %p81 = scmp.eq.s32.totalorder %s80, 0
      %s83 = sadd.s32 %s82, 1
      %s84 = scalar_select %p81, %s82, %s83
      %p87 = pneg %p81
      %p88 = scmp.eq.s32.totalorder %s20, 1
      %p89 = por %p87, %p88
      %p90 = scmp.ne.s32.totalorder %s82, %s85
      %p91 = scmp.eq.s32.totalorder %s20, 0
      %p92 = por %p90, %p91
      %p93 = scmp.ne.s32.totalorder %s82, %s85
      %p94 = scmp.eq.s32.totalorder %s25, 1
      %p95 = por %p93, %p94
      %p96 = scmp.ne.s32.totalorder %s85, %s86
      %p97 = scmp.eq.s32.totalorder %s25, 0
      %p98 = por %p96, %p97
      %p99 = scmp.ne.s32.totalorder %s85, %s86
      %p100 = scmp.eq.s32.totalorder %s26, 1
      %p101 = por %p99, %p100
      %p103 = scmp.ne.s32.totalorder %s86, %s102
      %p104 = scmp.eq.s32.totalorder %s26, 0
      %p105 = por %p103, %p104
      %s106 = ssub.s32 %s20, %s27
      %p107 = scmp.eq.s32.totalorder %s106, 0
      %s109 = sadd.s32 %s108, 1
      %s110 = scalar_select %p107, %s108, %s109
      %p113 = pneg %p107
      %p114 = scmp.eq.s32.totalorder %s20, 1
      %p115 = por %p113, %p114
      %p116 = scmp.ne.s32.totalorder %s108, %s111
      %p117 = scmp.eq.s32.totalorder %s20, 0
      %p118 = por %p116, %p117
      %p119 = scmp.ne.s32.totalorder %s108, %s111
      %p120 = scmp.eq.s32.totalorder %s25, 1
      %p121 = por %p119, %p120
      %p122 = scmp.ne.s32.totalorder %s111, %s112
      %p123 = scmp.eq.s32.totalorder %s25, 0
      %p124 = por %p122, %p123
      %p125 = scmp.ne.s32.totalorder %s111, %s112
      %p126 = scmp.eq.s32.totalorder %s26, 1
      %p127 = por %p125, %p126
      %p129 = scmp.ne.s32.totalorder %s112, %s128
      %p130 = scmp.eq.s32.totalorder %s26, 0
      %p131 = por %p129, %p130
      %s132 = ssub.s32 %s20, %s27
      %p133 = scmp.eq.s32.totalorder %s132, 0
      %s135 = sadd.s32 %s134, 1
      %s136 = scalar_select %p133, %s134, %s135
      %p139 = pneg %p133
      %p140 = scmp.eq.s32.totalorder %s20, 1
      %p141 = por %p139, %p140
      %p142 = scmp.ne.s32.totalorder %s134, %s137
      %p143 = scmp.eq.s32.totalorder %s20, 0
      %p144 = por %p142, %p143
      %p145 = scmp.ne.s32.totalorder %s134, %s137
      %p146 = scmp.eq.s32.totalorder %s25, 1
      %p147 = por %p145, %p146
      %p148 = scmp.ne.s32.totalorder %s137, %s138
      %p149 = scmp.eq.s32.totalorder %s25, 0
      %p150 = por %p148, %p149
      %p151 = scmp.ne.s32.totalorder %s137, %s138
      %p152 = scmp.eq.s32.totalorder %s26, 1
      %p153 = por %p151, %p152
      %p155 = scmp.ne.s32.totalorder %s138, %s154
      %p156 = scmp.eq.s32.totalorder %s26, 0
      %p157 = por %p155, %p156
      %s158 = ssub.s32 %s20, %s27
      %p159 = scmp.eq.s32.totalorder %s158, 0
      %s161 = sadd.s32 %s160, 1
      %s162 = scalar_select %p159, %s160, %s161
      %p165 = pneg %p159
      %p166 = scmp.eq.s32.totalorder %s20, 1
      %p167 = por %p165, %p166
      %p168 = scmp.ne.s32.totalorder %s160, %s163
      %p169 = scmp.eq.s32.totalorder %s20, 0
      %p170 = por %p168, %p169
      %p171 = scmp.ne.s32.totalorder %s160, %s163
      %p172 = scmp.eq.s32.totalorder %s25, 1
      %p173 = por %p171, %p172
      %p174 = scmp.ne.s32.totalorder %s163, %s164
      %p175 = scmp.eq.s32.totalorder %s25, 0
      %p176 = por %p174, %p175
      %p177 = scmp.ne.s32.totalorder %s163, %s164
      %p178 = scmp.eq.s32.totalorder %s26, 1
      %p179 = por %p177, %p178
      %p181 = scmp.ne.s32.totalorder %s164, %s180
      %p182 = scmp.eq.s32.totalorder %s26, 0
      %p183 = por %p181, %p182
      %p184 = scmp.le.s32.totalorder 1, %s20
      %p185 = scmp.lt.s32.totalorder %s20, 3
      %p186 = pnand %p184, %p185
      %p187 = pneg %p186
      // Predicated region
      $region9: #{tpu_custom_call.1} parent=5 // pred_check
        _
      $region10: #{tpu_custom_call.1} parent=5 // pred_check_branch
        %189 = sbr.rel (%p186) target = $region12
      $region11: #{tpu_custom_call.1} parent=5 // pred_region
        %s190 = ssub.s32 %s20, 1
      $region12: #{tpu_custom_call.1} parent=5 // pred_fallthru
        _
      %p191 = scmp.lt.s32.totalorder %s20, 2
      // Predicated region
      $region13: #{tpu_custom_call.1} parent=5 // pred_check
        %p192 = pneg %p191
      $region14: #{tpu_custom_call.1} parent=5 // pred_check_branch
        %194 = sbr.rel (%p192) target = $region16
      $region15: #{tpu_custom_call.1} parent=5 // pred_region
        // Predicated region
        $region17: #{tpu_custom_call.1} parent=15 // pred_check
          %p195 = pneg %p40
        $region18: #{tpu_custom_call.1} parent=15 // pred_check_branch
          %197 = sbr.rel (%p195) target = $region20
        $region19: #{tpu_custom_call.1} parent=15 // pred_region
          %s198 = sand.u32 %s30, 1
          %s199 = scalar_lea.sflag [#allocation3], %s198
          %s200 = sand.u32 %s30, 1
          %s201 = smul.addr %s200, 16
          %s202 = scalar_lea.vmem [#allocation2], %s201
          %s203 = smul.u32 2, %s20
          %s205 = ssub.s32 256, 256
          %206 = vsyncadd %s199, %s205
          %s207 = smul.addr %s203, 128
          %s208 = scalar_lea.hbm %s0, %s207
          %s209 = sshll.u32 %s202, 4
          %s210 = int_to_ptr.vmem [resolvable:$true] %s209
          %215 = dma.hbm_to_vmem [thread:$0]  %s208, 256, %s210, %s199, 128, 128, 8
        $region20: #{tpu_custom_call.1} parent=15 // pred_fallthru
          _
        // Predicated region
        $region21: #{tpu_custom_call.1} parent=15 // pred_check
          %p216 = pneg %p66
        $region22: #{tpu_custom_call.1} parent=15 // pred_check_branch
          %218 = sbr.rel (%p216) target = $region24
        $region23: #{tpu_custom_call.1} parent=15 // pred_region
          %s219 = sand.u32 %s20, 1
          %s220 = scalar_lea.sflag [#allocation6], %s219
          %s221 = sand.u32 %s56, 1
          %s222 = smul.addr %s221, 64
          %s223 = scalar_lea.vmem [#allocation5], %s222
          %s224 = smul.u32 2, %s20
          %s226 = ssub.s32 1024, 1024
          %227 = vsyncadd %s220, %s226
          %s228 = smul.addr %s224, 4
          %s229 = smul.addr %s228, 128
          %s230 = scalar_lea.hbm %s1, %s229
          %s231 = sshll.u32 %s223, 4
          %s232 = int_to_ptr.vmem [resolvable:$true] %s231
          %237 = dma.hbm_to_vmem [thread:$0]  %s230, 1024, %s232, %s220, 128, 128, 8
        $region24: #{tpu_custom_call.1} parent=15 // pred_fallthru
          _
        // Predicated region
        $region25: #{tpu_custom_call.1} parent=15 // pred_check
          %p238 = pneg %p92
        $region26: #{tpu_custom_call.1} parent=15 // pred_check_branch
          %240 = sbr.rel (%p238) target = $region28
        $region27: #{tpu_custom_call.1} parent=15 // pred_region
          %s241 = smul.u32 2, %s20
          %p242 = scmp.lt.s32.totalorder %s241, 3
          %s243 = scalar_select %p242, %s241, 3
          %s244 = scalar_lea.vmem %s2, %s243
          %s245 = smul.u32 2, %s20
        $region28: #{tpu_custom_call.1} parent=15 // pred_fallthru
          _
        // Predicated region
        $region29: #{tpu_custom_call.1} parent=15 // pred_check
          %p246 = pneg %p118
        $region30: #{tpu_custom_call.1} parent=15 // pred_check_branch
          %248 = sbr.rel (%p246) target = $region32
        $region31: #{tpu_custom_call.1} parent=15 // pred_region
          %s249 = sand.u32 %s20, 1
          %s250 = scalar_lea.sflag [#allocation6], %s249
          %s251 = sand.u32 %s108, 1
          %s252 = smul.addr %s251, 32
          %s253 = scalar_lea.vmem [#allocation7], %s252
          %s254 = smul.u32 2, %s20
          %s256 = ssub.s32 512, 512
          %257 = vsyncadd %s250, %s256
          %s258 = smul.addr %s254, 2
          %s259 = smul.addr %s258, 128
          %s260 = scalar_lea.hbm %s3, %s259
          %s261 = sshll.u32 %s253, 4
          %s262 = int_to_ptr.vmem [resolvable:$true] %s261
          %267 = dma.hbm_to_vmem [thread:$0]  %s260, 512, %s262, %s250, 128, 128, 8
        $region32: #{tpu_custom_call.1} parent=15 // pred_fallthru
          _
        // Predicated region
        $region33: #{tpu_custom_call.1} parent=15 // pred_check
          %p268 = pneg %p144
        $region34: #{tpu_custom_call.1} parent=15 // pred_check_branch
          %270 = sbr.rel (%p268) target = $region36
        $region35: #{tpu_custom_call.1} parent=15 // pred_region
          %s271 = smul.u32 2, %s20
          %p272 = scmp.lt.s32.totalorder %s271, 3
          %s273 = scalar_select %p272, %s271, 3
          %s274 = scalar_lea.vmem %s4, %s273
          %s275 = smul.u32 2, %s20
        $region36: #{tpu_custom_call.1} parent=15 // pred_fallthru
          _
      $region16: #{tpu_custom_call.1} parent=5 // pred_fallthru
        _
      %p276 = scmp.le.s32.totalorder 1, %s20
      %p277 = scmp.lt.s32.totalorder %s20, 3
      %p278 = pnand %p276, %p277
      %p279 = pneg %p278
      // Predicated region
      $region37: #{tpu_custom_call.1} parent=5 // pred_check
        _
      $region38: #{tpu_custom_call.1} parent=5 // pred_check_branch
        %281 = sbr.rel (%p278) target = $region40
      $region39: #{tpu_custom_call.1} parent=5 // pred_region
        %s282 = ssub.s32 %s20, 1
        %s283 = sand.u32 %s33, 1
        %s284 = scalar_lea.sflag [#allocation3], %s283
        %s285 = sand.u32 %s33, 1
        %s286 = smul.addr %s285, 16
        %s287 = scalar_lea.vmem [#allocation2], %s286
        // Predicated region
        $region41: #{tpu_custom_call.1} parent=39 // pred_check
          %p288 = pneg %p46
        $region42: #{tpu_custom_call.1} parent=39 // pred_check_branch
          %290 = sbr.rel (%p288) target = $region44
        $region43: #{tpu_custom_call.1} parent=39 // pred_region
          %291 = dma.done %s284, 256
        $region44: #{tpu_custom_call.1} parent=39 // pred_fallthru
          _
        %s292 = sand.u32 %s25, 1
        %s293 = scalar_lea.sflag [#allocation6], %s292
        %s294 = sand.u32 %s59, 1
        %s295 = smul.addr %s294, 64
        %s296 = scalar_lea.vmem [#allocation5], %s295
        // Predicated region
        $region45: #{tpu_custom_call.1} parent=39 // pred_check
          %p297 = pneg %p72
        $region46: #{tpu_custom_call.1} parent=39 // pred_check_branch
          %299 = sbr.rel (%p297) target = $region48
        $region47: #{tpu_custom_call.1} parent=39 // pred_region
          %300 = dma.done %s293, 1024
        $region48: #{tpu_custom_call.1} parent=39 // pred_fallthru
          _
        %s301 = sand.u32 %s25, 1
        %s302 = scalar_lea.sflag [#allocation6], %s301
        %s303 = sand.u32 %s111, 1
        %s304 = smul.addr %s303, 32
        %s305 = scalar_lea.vmem [#allocation7], %s304
        // Predicated region
        $region49: #{tpu_custom_call.1} parent=39 // pred_check
          %p306 = pneg %p124
        $region50: #{tpu_custom_call.1} parent=39 // pred_check_branch
          %308 = sbr.rel (%p306) target = $region52
        $region51: #{tpu_custom_call.1} parent=39 // pred_region
          %309 = dma.done %s302, 512
        $region52: #{tpu_custom_call.1} parent=39 // pred_fallthru
          _
        %s310 = sand.u32 %s33, 1
        %s311 = scalar_lea.sflag [#allocation3], %s310
        %s312 = sand.u32 %s33, 1
        %s313 = smul.addr %s312, 16
        %s314 = scalar_lea.vmem [#allocation2], %s313
        %p315 = pneg %p46
        %p316 = pneg %p43
        %s317 = sand.u32 %s25, 1
        %s318 = scalar_lea.sflag [#allocation6], %s317
        %s319 = sand.u32 %s59, 1
        %s320 = smul.addr %s319, 64
        %s321 = scalar_lea.vmem [#allocation5], %s320
        %p322 = pneg %p72
        %p323 = pneg %p69
        %s324 = smul.u32 2, %s25
        %p325 = scmp.lt.s32.totalorder %s324, 3
        %s326 = scalar_select %p325, %s324, 3
        %s327 = scalar_lea.vmem %s2, %s326
        %p328 = pneg %p98
        %p329 = pneg %p95
        %s330 = sand.u32 %s25, 1
        %s331 = scalar_lea.sflag [#allocation6], %s330
        %s332 = sand.u32 %s111, 1
        %s333 = smul.addr %s332, 32
        %s334 = scalar_lea.vmem [#allocation7], %s333
        %p335 = pneg %p124
        %p336 = pneg %p121
        %s337 = smul.u32 2, %s25
        %p338 = scmp.lt.s32.totalorder %s337, 3
        %s339 = scalar_select %p338, %s337, 3
        %s340 = scalar_lea.vmem %s4, %s339
        %p341 = pneg %p150
        %p342 = pneg %p147
        %p343 = pneg %p176
        %p344 = pneg %p173
        %s345 = sand.u32 %s163, 1
        %s346 = scalar_lea.sflag [#allocation4], %s345
        %s347 = sand.u32 %s163, 1
        %s348 = smul.addr %s347, 2
        %s349 = scalar_lea.vmem [#allocation8], %s348
        %s350 = smul.u32 2, %s25
        %s351 = smul.u32 2, %s25
        %s352 = smul.u32 2, %s25
        %p353 = scmp.lt.s32.totalorder %s352, 3
        %s354 = scalar_select %p353, %s352, 3
        %s355 = scalar_lea.vmem %s2, %s354
        %s356 = smul.u32 2, %s25
        %s357 = smul.u32 2, %s25
        %s358 = smul.u32 2, %s25
        %p359 = scmp.lt.s32.totalorder %s358, 3
        %s360 = scalar_select %p359, %s358, 3
        %s361 = scalar_lea.vmem %s4, %s360
        %s362 = smul.u32 2, %s25
        %s363 = smul.u32 2, %s25
        %v364 = vld [vmem:[%s287] sm:$0xff]
        %v365 = vld [vmem:[%s287 + $0x8] sm:$0xff]
        %v366 = vld [vmem:[%s296] sm:$0xff]
        %v367 = vld [vmem:[%s296 + $0x8] sm:$0xff]
        %v368 = vld [vmem:[%s296 + $0x10] sm:$0xff]
        %v369 = vld [vmem:[%s296 + $0x18] sm:$0xff]
        %v370 = vld [vmem:[%s296 + $0x20] sm:$0xff]
        %v371 = vld [vmem:[%s296 + $0x28] sm:$0xff]
        %v372 = vld [vmem:[%s296 + $0x30] sm:$0xff]
        %v373 = vld [vmem:[%s296 + $0x38] sm:$0xff]
        %v374 = vld [vmem:[%s355] sm:$0x1]
        %v375 = vld [vmem:[%s355 + $0x1] sm:$0x1]
        %v378 = vlaneseq
        %v379 = vshrl.u32 %v378, 7
        %v380 = vsub.s32 0, %v379
        %v381 = vrot.slane %v374, %v380
        %v382 = vlaneseq
        %v383 = vshrl.u32 %v382, 7
        %v384 = vsub.s32 0, %v383
        %v385 = vrot.slane %v375, %v384
        %vm388 = vcmask 261120
        %v390 = vsel %vm388, %v364, 0
        %392 = vmatprep.subr.mxu0 0.0
        %393 = vmatpush1.msra.mxu0 %v366
        %394 = vmatprep.subr.mxu0 0.0
        %395 = vmatpush1.msra.mxu0 %v367
        %396 = vmatprep.subr.mxu0 0.0
        %397 = vmatpush1.msra.mxu0 %v368
        %398 = vmatprep.subr.mxu0 0.0
        %399 = vmatpush1.msra.mxu0 %v369
        %400 = vmatprep.subr.mxu0 0.0
        %401 = vmatpush1.msra.mxu0 0.0
        %402 = vmatprep.subr.mxu0 0.0
        %403 = vmatpush1.msra.mxu0 0.0
        %404 = vmatprep.subr.mxu0 0.0
        %405 = vmatpush1.msra.mxu0 0.0
        %406 = vmatprep.subr.mxu0 0.0
        %407 = vmatpush1.msra.mxu0 0.0
        %408 = vmatprep.subr.mxu0 0.0
        %409 = vmatpush1.msra.mxu0 0.0
        %410 = vmatprep.subr.mxu0 0.0
        %411 = vmatpush1.msra.mxu0 0.0
        %412 = vmatprep.subr.mxu0 0.0
        %413 = vmatpush1.msra.mxu0 0.0
        %414 = vmatprep.subr.mxu0 0.0
        %415 = vmatpush1.msra.mxu0 0.0
        %416 = vmatprep.subr.mxu0 0.0
        %417 = vmatpush1.msra.mxu0 0.0
        %418 = vmatprep.subr.mxu0 0.0
        %419 = vmatpush1.msra.mxu0 0.0
        %420 = vmatprep.subr.mxu0 0.0
        %421 = vmatpush1.msra.mxu0 0.0
        %422 = vmatprep.subr.mxu0 0.0
        %423 = vmatpush1.msra.mxu0 0.0
        %424 = vmatprep.subr.mxu0 0.0
        %425 = vmatpush1.msra.mxu0 0.0
        %426 = vmatprep.subr.mxu0 0.0
        %427 = vmatpush1.msra.mxu0 0.0
        %428 = vmatprep.subr.mxu0 0.0
        %429 = vmatpush1.msra.mxu0 0.0
        %430 = vmatprep.subr.mxu0 0.0
        %431 = vmatpush1.msra.mxu0 0.0
        %432 = vmatprep.subr.mxu0 0.0
        %433 = vmatpush1.msra.mxu0 0.0
        %434 = vmatprep.subr.mxu0 0.0
        %435 = vmatpush1.msra.mxu0 0.0
        %436 = vmatprep.subr.mxu0 0.0
        %437 = vmatpush1.msra.mxu0 0.0
        %438 = vmatprep.subr.mxu0 0.0
        %439 = vmatpush1.msra.mxu0 0.0
        %440 = vmatprep.subr.mxu0 0.0
        %441 = vmatpush1.msra.mxu0 0.0
        %442 = vmatprep.subr.mxu0 0.0
        %443 = vmatpush1.msra.mxu0 0.0
        %444 = vmatprep.subr.mxu0 0.0
        %445 = vmatpush1.msra.mxu0 0.0
        %446 = vmatprep.subr.mxu0 0.0
        %447 = vmatpush1.msra.mxu0 0.0
        %448 = vmatprep.subr.mxu0 0.0
        %449 = vmatpush1.msra.mxu0 0.0
        %450 = vmatprep.subr.mxu0 0.0
        %451 = vmatpush1.msra.mxu0 0.0
        %452 = vmatprep.subr.mxu0 0.0
        %453 = vmatpush1.msra.mxu0 0.0
        %454 = vmatprep.subr.mxu0 0.0
        %455 = vmatpush1.msra.mxu0 0.0
        %456 = vmatprep.mubr.f32.mxu0 0.0
        %457 = vmatmul.mubr.f32.gmra.mrb[0].mxu0 %v390
        %v458 = vpop.f32.mrb[0].mxu0
        %v459 = vadd.f32 %v381, %v458
        %v460 = vpop.f32.mrb[0].mxu0
        %461 = vdwg.mxu0
        %v463 = vsel %vm388, %v365, 0
        %465 = vmatprep.subr.mxu0 0.0
        %466 = vmatpush1.msra.mxu0 %v370
        %467 = vmatprep.subr.mxu0 0.0
        %468 = vmatpush1.msra.mxu0 %v371
        %469 = vmatprep.subr.mxu0 0.0
        %470 = vmatpush1.msra.mxu0 %v372
        %471 = vmatprep.subr.mxu0 0.0
        %472 = vmatpush1.msra.mxu0 %v373
        %473 = vmatprep.subr.mxu0 0.0
        %474 = vmatpush1.msra.mxu0 0.0
        %475 = vmatprep.subr.mxu0 0.0
        %476 = vmatpush1.msra.mxu0 0.0
        %477 = vmatprep.subr.mxu0 0.0
        %478 = vmatpush1.msra.mxu0 0.0
        %479 = vmatprep.subr.mxu0 0.0
        %480 = vmatpush1.msra.mxu0 0.0
        %481 = vmatprep.subr.mxu0 0.0
        %482 = vmatpush1.msra.mxu0 0.0
        %483 = vmatprep.subr.mxu0 0.0
        %484 = vmatpush1.msra.mxu0 0.0
        %485 = vmatprep.subr.mxu0 0.0
        %486 = vmatpush1.msra.mxu0 0.0
        %487 = vmatprep.subr.mxu0 0.0
        %488 = vmatpush1.msra.mxu0 0.0
        %489 = vmatprep.subr.mxu0 0.0
        %490 = vmatpush1.msra.mxu0 0.0
        %491 = vmatprep.subr.mxu0 0.0
        %492 = vmatpush1.msra.mxu0 0.0
        %493 = vmatprep.subr.mxu0 0.0
        %494 = vmatpush1.msra.mxu0 0.0
        %495 = vmatprep.subr.mxu0 0.0
        %496 = vmatpush1.msra.mxu0 0.0
        %497 = vmatprep.subr.mxu0 0.0
        %498 = vmatpush1.msra.mxu0 0.0
        %499 = vmatprep.subr.mxu0 0.0
        %500 = vmatpush1.msra.mxu0 0.0
        %501 = vmatprep.subr.mxu0 0.0
        %502 = vmatpush1.msra.mxu0 0.0
        %503 = vmatprep.subr.mxu0 0.0
        %504 = vmatpush1.msra.mxu0 0.0
        %505 = vmatprep.subr.mxu0 0.0
        %506 = vmatpush1.msra.mxu0 0.0
        %507 = vmatprep.subr.mxu0 0.0
        %508 = vmatpush1.msra.mxu0 0.0
        %509 = vmatprep.subr.mxu0 0.0
        %510 = vmatpush1.msra.mxu0 0.0
        %511 = vmatprep.subr.mxu0 0.0
        %512 = vmatpush1.msra.mxu0 0.0
        %513 = vmatprep.subr.mxu0 0.0
        %514 = vmatpush1.msra.mxu0 0.0
        %515 = vmatprep.subr.mxu0 0.0
        %516 = vmatpush1.msra.mxu0 0.0
        %517 = vmatprep.subr.mxu0 0.0
        %518 = vmatpush1.msra.mxu0 0.0
        %519 = vmatprep.subr.mxu0 0.0
        %520 = vmatpush1.msra.mxu0 0.0
        %521 = vmatprep.subr.mxu0 0.0
        %522 = vmatpush1.msra.mxu0 0.0
        %523 = vmatprep.subr.mxu0 0.0
        %524 = vmatpush1.msra.mxu0 0.0
        %525 = vmatprep.subr.mxu0 0.0
        %526 = vmatpush1.msra.mxu0 0.0
        %527 = vmatprep.subr.mxu0 0.0
        %528 = vmatpush1.msra.mxu0 0.0
        %529 = vmatprep.mubr.f32.mxu0 0.0
        %530 = vmatmul.mubr.f32.gmra.mrb[0].mxu0 %v463
        %v531 = vpop.f32.mrb[0].mxu0
        %v532 = vadd.f32 %v385, %v531
        %v533 = vpop.f32.mrb[0].mxu0
        %534 = vdwg.mxu0
        %v535 = vmax.f32 %v459, 0.0
        %v536 = vmax.f32 %v532, 0.0
        %v537 = vld [vmem:[%s305] sm:$0xff]
        %v538 = vld [vmem:[%s305 + $0x8] sm:$0xff]
        %v539 = vld [vmem:[%s305 + $0x10] sm:$0xff]
        %v540 = vld [vmem:[%s305 + $0x18] sm:$0xff]
        %v541 = vld [vmem:[%s361] sm:$0x1]
        %v542 = vld [vmem:[%s361 + $0x1] sm:$0x1]
        %v545 = vlaneseq
        %v546 = vshrl.u32 %v545, 7
        %v547 = vsub.s32 0, %v546
        %v548 = vrot.slane %v541, %v547
        %v549 = vlaneseq
        %v550 = vshrl.u32 %v549, 7
        %v551 = vsub.s32 0, %v550
        %v552 = vrot.slane %v542, %v551
        %555 = vmatprep.subr.mxu0 0.0
        %556 = vmatpush1.xpose.msra.mxu0 %v537
        %557 = vmatprep.subr.mxu0 0.0
        %558 = vmatpush1.xpose.msra.mxu0 %v538
        %559 = vmatprep.subr.mxu0 0.0
        %560 = vmatpush1.xpose.msra.mxu0 0.0
        %561 = vmatprep.subr.mxu0 0.0
        %562 = vmatpush1.xpose.msra.mxu0 0.0
        %563 = vmatprep.subr.mxu0 0.0
        %564 = vmatpush1.xpose.msra.mxu0 0.0
        %565 = vmatprep.subr.mxu0 0.0
        %566 = vmatpush1.xpose.msra.mxu0 0.0
        %567 = vmatprep.subr.mxu0 0.0
        %568 = vmatpush1.xpose.msra.mxu0 0.0
        %569 = vmatprep.subr.mxu0 0.0
        %570 = vmatpush1.xpose.msra.mxu0 0.0
        %571 = vmatprep.subr.mxu0 0.0
        %572 = vmatpush1.xpose.msra.mxu0 0.0
        %573 = vmatprep.subr.mxu0 0.0
        %574 = vmatpush1.xpose.msra.mxu0 0.0
        %575 = vmatprep.subr.mxu0 0.0
        %576 = vmatpush1.xpose.msra.mxu0 0.0
        %577 = vmatprep.subr.mxu0 0.0
        %578 = vmatpush1.xpose.msra.mxu0 0.0
        %579 = vmatprep.subr.mxu0 0.0
        %580 = vmatpush1.xpose.msra.mxu0 0.0
        %581 = vmatprep.subr.mxu0 0.0
        %582 = vmatpush1.xpose.msra.mxu0 0.0
        %583 = vmatprep.subr.mxu0 0.0
        %584 = vmatpush1.xpose.msra.mxu0 0.0
        %585 = vmatprep.subr.mxu0 0.0
        %586 = vmatpush1.xpose.msra.mxu0 0.0
        %587 = vmatprep.subr.mxu0 0.0
        %588 = vmatpush1.xpose.msra.mxu0 0.0
        %589 = vmatprep.subr.mxu0 0.0
        %590 = vmatpush1.xpose.msra.mxu0 0.0
        %591 = vmatprep.subr.mxu0 0.0
        %592 = vmatpush1.xpose.msra.mxu0 0.0
        %593 = vmatprep.subr.mxu0 0.0
        %594 = vmatpush1.xpose.msra.mxu0 0.0
        %595 = vmatprep.subr.mxu0 0.0
        %596 = vmatpush1.xpose.msra.mxu0 0.0
        %597 = vmatprep.subr.mxu0 0.0
        %598 = vmatpush1.xpose.msra.mxu0 0.0
        %599 = vmatprep.subr.mxu0 0.0
        %600 = vmatpush1.xpose.msra.mxu0 0.0
        %601 = vmatprep.subr.mxu0 0.0
        %602 = vmatpush1.xpose.msra.mxu0 0.0
        %603 = vmatprep.subr.mxu0 0.0
        %604 = vmatpush1.xpose.msra.mxu0 0.0
        %605 = vmatprep.subr.mxu0 0.0
        %606 = vmatpush1.xpose.msra.mxu0 0.0
        %607 = vmatprep.subr.mxu0 0.0
        %608 = vmatpush1.xpose.msra.mxu0 0.0
        %609 = vmatprep.subr.mxu0 0.0
        %610 = vmatpush1.xpose.msra.mxu0 0.0
        %611 = vmatprep.subr.mxu0 0.0
        %612 = vmatpush1.xpose.msra.mxu0 0.0
        %613 = vmatprep.subr.mxu0 0.0
        %614 = vmatpush1.xpose.msra.mxu0 0.0
        %615 = vmatprep.subr.mxu0 0.0
        %616 = vmatpush1.xpose.msra.mxu0 0.0
        %617 = vmatprep.subr.mxu0 0.0
        %618 = vmatpush1.xpose.msra.mxu0 0.0
        %619 = vmatprep.mubr.f32.mxu0 0.0
        %620 = vmatmul.mubr.f32.gmra.mrb[0].mxu0 %v535
        %v621 = vpop.f32.mrb[0].mxu0
        %v622 = vadd.f32 %v548, %v621
        %v623 = vpop.f32.mrb[0].mxu0
        %624 = vdwg.mxu0
        %625 = vmatprep.subr.mxu0 0.0
        %626 = vmatpush1.xpose.msra.mxu0 %v539
        %627 = vmatprep.subr.mxu0 0.0
        %628 = vmatpush1.xpose.msra.mxu0 %v540
        %629 = vmatprep.subr.mxu0 0.0
        %630 = vmatpush1.xpose.msra.mxu0 0.0
        %631 = vmatprep.subr.mxu0 0.0
        %632 = vmatpush1.xpose.msra.mxu0 0.0
        %633 = vmatprep.subr.mxu0 0.0
        %634 = vmatpush1.xpose.msra.mxu0 0.0
        %635 = vmatprep.subr.mxu0 0.0
        %636 = vmatpush1.xpose.msra.mxu0 0.0
        %637 = vmatprep.subr.mxu0 0.0
        %638 = vmatpush1.xpose.msra.mxu0 0.0
        %639 = vmatprep.subr.mxu0 0.0
        %640 = vmatpush1.xpose.msra.mxu0 0.0
        %641 = vmatprep.subr.mxu0 0.0
        %642 = vmatpush1.xpose.msra.mxu0 0.0
        %643 = vmatprep.subr.mxu0 0.0
        %644 = vmatpush1.xpose.msra.mxu0 0.0
        %645 = vmatprep.subr.mxu0 0.0
        %646 = vmatpush1.xpose.msra.mxu0 0.0
        %647 = vmatprep.subr.mxu0 0.0
        %648 = vmatpush1.xpose.msra.mxu0 0.0
        %649 = vmatprep.subr.mxu0 0.0
        %650 = vmatpush1.xpose.msra.mxu0 0.0
        %651 = vmatprep.subr.mxu0 0.0
        %652 = vmatpush1.xpose.msra.mxu0 0.0
        %653 = vmatprep.subr.mxu0 0.0
        %654 = vmatpush1.xpose.msra.mxu0 0.0
        %655 = vmatprep.subr.mxu0 0.0
        %656 = vmatpush1.xpose.msra.mxu0 0.0
        %657 = vmatprep.subr.mxu0 0.0
        %658 = vmatpush1.xpose.msra.mxu0 0.0
        %659 = vmatprep.subr.mxu0 0.0
        %660 = vmatpush1.xpose.msra.mxu0 0.0
        %661 = vmatprep.subr.mxu0 0.0
        %662 = vmatpush1.xpose.msra.mxu0 0.0
        %663 = vmatprep.subr.mxu0 0.0
        %664 = vmatpush1.xpose.msra.mxu0 0.0
        %665 = vmatprep.subr.mxu0 0.0
        %666 = vmatpush1.xpose.msra.mxu0 0.0
        %667 = vmatprep.subr.mxu0 0.0
        %668 = vmatpush1.xpose.msra.mxu0 0.0
        %669 = vmatprep.subr.mxu0 0.0
        %670 = vmatpush1.xpose.msra.mxu0 0.0
        %671 = vmatprep.subr.mxu0 0.0
        %672 = vmatpush1.xpose.msra.mxu0 0.0
        %673 = vmatprep.subr.mxu0 0.0
        %674 = vmatpush1.xpose.msra.mxu0 0.0
        %675 = vmatprep.subr.mxu0 0.0
        %676 = vmatpush1.xpose.msra.mxu0 0.0
        %677 = vmatprep.subr.mxu0 0.0
        %678 = vmatpush1.xpose.msra.mxu0 0.0
        %679 = vmatprep.subr.mxu0 0.0
        %680 = vmatpush1.xpose.msra.mxu0 0.0
        %681 = vmatprep.subr.mxu0 0.0
        %682 = vmatpush1.xpose.msra.mxu0 0.0
        %683 = vmatprep.subr.mxu0 0.0
        %684 = vmatpush1.xpose.msra.mxu0 0.0
        %685 = vmatprep.subr.mxu0 0.0
        %686 = vmatpush1.xpose.msra.mxu0 0.0
        %687 = vmatprep.subr.mxu0 0.0
        %688 = vmatpush1.xpose.msra.mxu0 0.0
        %689 = vmatprep.mubr.f32.mxu0 0.0
        %690 = vmatmul.mubr.f32.gmra.mrb[0].mxu0 %v536
        %v691 = vpop.f32.mrb[0].mxu0
        %v692 = vadd.f32 %v552, %v691
        %v693 = vpop.f32.mrb[0].mxu0
        %694 = vdwg.mxu0
        %v697 = vrot.slane %v692, 7
        %vm698 = vcmask 1041409
        %v699 = vsel %vm698, %v697, %v622
        %v701 = vrot.slane %v622, 1
        %v702 = vsel %vm698, %v692, %v701
        %703 = vrot.lane.b32.xlu0 %v702, 16
        %v704 = vpop.permute.xlu0 %703
        %v706 = vrot.slane %v622, 2
        %v707 = vrot.slane %v692, 1
        %v708 = vsel %vm698, %v707, %v706
        %709 = vrot.lane.b32.xlu0 %v708, 32
        %v710 = vpop.permute.xlu0 %709
        %v712 = vrot.slane %v622, 3
        %v713 = vrot.slane %v692, 2
        %v714 = vsel %vm698, %v713, %v712
        %715 = vrot.lane.b32.xlu0 %v714, 48
        %v716 = vpop.permute.xlu0 %715
        %v718 = vrot.slane %v622, 4
        %v719 = vrot.slane %v692, 3
        %v720 = vsel %vm698, %v719, %v718
        %721 = vrot.lane.b32.xlu0 %v720, 64
        %v722 = vpop.permute.xlu0 %721
        %v724 = vrot.slane %v622, 5
        %v725 = vrot.slane %v692, 4
        %v726 = vsel %vm698, %v725, %v724
        %727 = vrot.lane.b32.xlu0 %v726, 80
        %v728 = vpop.permute.xlu0 %727
        %v730 = vrot.slane %v622, 6
        %v731 = vrot.slane %v692, 5
        %v732 = vsel %vm698, %v731, %v730
        %733 = vrot.lane.b32.xlu0 %v732, 96
        %v734 = vpop.permute.xlu0 %733
        %v736 = vrot.slane %v622, 7
        %v737 = vrot.slane %v692, 6
        %v738 = vsel %vm698, %v737, %v736
        %739 = vrot.lane.b32.xlu0 %v738, 112
        %v740 = vpop.permute.xlu0 %739
        %vm742 = vcmask 130048
        %v743 = vsel %vm742, %v699, %v704
        %v744 = vsel %vm388, %v743, %v710
        %vm745 = vcmask 392192
        %v746 = vsel %vm745, %v744, %v716
        %vm747 = vcmask 523264
        %v748 = vsel %vm747, %v746, %v722
        %vm749 = vcmask 654336
        %v750 = vsel %vm749, %v748, %v728
        %vm751 = vcmask 785408
        %v752 = vsel %vm751, %v750, %v734
        %vm753 = vcmask 916480
        %v754 = vsel %vm753, %v752, %v740
        %v757 = vunpack.c.l.s4 1966171168
        %v758 = vunpack.c.0.s8 %v757
        %v759 = vlaneseq
        %v760 = vshrl.u32 %v759, 7
        %v761 = vsub.s32 %v758, %v760
        %v762 = vrot.slane %v754, %v761
        %v763 = vcombine.high %v762, %v762
        %v765 = vunpack.c.l.s4 1966171168
        %v766 = vunpack.c.0.s8 %v765
        %v767 = vlaneseq
        %v768 = vshrl.u32 %v767, 7
        %v769 = vsub.s32 %v766, %v768
        %v770 = vrot.slane %v762, %v769
        %v772 = vunpack.c.l.s4 1966171168
        %v773 = vunpack.c.0.s8 %v772
        %v774 = vlaneseq
        %v775 = vshrl.u32 %v774, 7
        %v776 = vsub.s32 %v773, %v775
        %v777 = vrot.slane %v763, %v776
        %780 = vst [vmem:[%s349] sm:$0x1] %v770
        %781 = vst [vmem:[%s349 + $0x1] sm:$0x1] %v777
        %s782 = sand.u32 %s163, 1
        %s783 = scalar_lea.sflag [#allocation4], %s782
        %s784 = sand.u32 %s163, 1
        %s785 = smul.addr %s784, 2
        %s786 = scalar_lea.vmem [#allocation8], %s785
        // Predicated region
        $region53: #{tpu_custom_call.1} parent=39 // pred_check
          %p787 = pneg %p173
        $region54: #{tpu_custom_call.1} parent=39 // pred_check_branch
          %789 = sbr.rel (%p787) target = $region56
        $region55: #{tpu_custom_call.1} parent=39 // pred_region
          %s790 = smul.u32 2, %s25
          %s792 = ssub.s32 32, 32
          %793 = vsyncadd %s783, %s792
          %s794 = smul.addr %s790, 16
          %s795 = scalar_lea.hbm %s5, %s794
          %s796 = sshll.u32 %s786, 4
          %s797 = int_to_ptr.vmem [resolvable:$true] %s796
          %802 = dma.vmem_to_hbm [thread:$0]  %s797, 32, %s795, %s783, 16, 16, 1
        $region56: #{tpu_custom_call.1} parent=39 // pred_fallthru
          _
      $region40: #{tpu_custom_call.1} parent=5 // pred_fallthru
        _
      %p803 = scmp.le.s32.totalorder 2, %s20
      // Predicated region
      $region57: #{tpu_custom_call.1} parent=5 // pred_check
        %p804 = pneg %p803
      $region58: #{tpu_custom_call.1} parent=5 // pred_check_branch
        %806 = sbr.rel (%p804) target = $region60
      $region59: #{tpu_custom_call.1} parent=5 // pred_region
        %s807 = ssub.s32 %s20, 2
        // Predicated region
        $region61: #{tpu_custom_call.1} parent=59 // pred_check
          %p808 = pneg %p179
        $region62: #{tpu_custom_call.1} parent=59 // pred_check_branch
          %810 = sbr.rel (%p808) target = $region64
        $region63: #{tpu_custom_call.1} parent=59 // pred_region
          %s811 = sand.u32 %s164, 1
          %s812 = scalar_lea.sflag [#allocation4], %s811
          %s813 = sand.u32 %s164, 1
          %s814 = smul.addr %s813, 2
          %s815 = scalar_lea.vmem [#allocation8], %s814
          %816 = dma.done %s812, 32
        $region64: #{tpu_custom_call.1} parent=59 // pred_fallthru
          _
      $region60: #{tpu_custom_call.1} parent=5 // pred_fallthru
        _
    $region6: #{tpu_custom_call.1} parent=1 // loop_footer
      %s24 = sadd.s32 1, %s20
    $region7: #{tpu_custom_call.1} parent=1 // loop_footer_branch
      %19 = sbr.rel target = $region3
    $region8: #{tpu_custom_call.1} parent=1 // loop_exit
      _
    %817 = vsyncpa [#allocation3], 1
    %s818 = scalar_lea.sflag [#allocation3], 1
    %819 = vsyncpa %s818, 1
    %820 = vsyncpa [#allocation6], 1
    %s821 = scalar_lea.sflag [#allocation6], 1
    %822 = vsyncpa %s821, 1
    %823 = vsyncpa [#allocation4], 1
    %s824 = scalar_lea.sflag [#allocation4], 1
    %825 = vsyncpa %s824, 1

</llo_original>
